<compile_context>
chip_gen: v7x
topology: tpu7x:2x2x1
jax: 0.10.0
libtpu: 0.0.40
codegen_flags: <defaults>
</compile_context>

<pallas_src>
import jax
import jax.numpy as jnp
from jax.experimental import pallas as pl
from jax.experimental.pallas import tpu as pltpu


# ----------------------------------------------------------------------------
# Kernel 1: ResnetBlockFC, writing hidden chunk-major [P/pc, H, pc]
# ----------------------------------------------------------------------------
def _resnet_kernel(feat_ref, w0_ref, b0_ref, wcat_ref, bcat_ref, hid_ref):
    """feat block [1, f_dim, tp] -> hidden block [1, tp/pc, H, pc]."""
    n_chunks_blk = hid_ref.shape[1]
    pc = hid_ref.shape[3]

    x = feat_ref[0]                                               # [f_dim, tp]
    xr = jnp.maximum(x, 0.0)
    net = jnp.maximum(
        jnp.dot(w0_ref[...], xr, preferred_element_type=jnp.float32)
        + b0_ref[...], 0.0)                                       # [size_h, tp]
    # Folded matmul: [w1.T | ws.T] @ [net; x]  (one K = size_h + f_dim push).
    y = jnp.concatenate([net, x], axis=0)                         # [size_h+f_dim, tp]
    h = (jnp.dot(wcat_ref[...], y, preferred_element_type=jnp.float32)
         + bcat_ref[...]).astype(hid_ref.dtype)                   # [H, tp]

    # Static lane-group slices -> contiguous [H, pc] stores (no XLU transpose).
    for cc in range(n_chunks_blk):
        hid_ref[0, cc] = h[:, cc * pc:(cc + 1) * pc]


# ----------------------------------------------------------------------------
# Kernel 2: scatter_max pooling over a sorted point segment + 1x1x1 conv
# ----------------------------------------------------------------------------
def _pool_conv_kernel(chunk0_ref, nch_ref, idx_ref, hid_ref, wc_ref, bc_ref,
                      out_ref, acc_ref):
    """grid = (N, V/tv).  Scans only this tile's (sorted) point chunks."""
    b = pl.program_id(0)
    j = pl.program_id(1)
    nch = nch_ref[b, j]
    c_dim = wc_ref.shape[0]
    tv = acc_ref.shape[0]

    @pl.when(nch == 0)
    def _():
        # No point maps to this voxel tile: pooled features are 0, so the
        # 1x1x1 conv output is just the bias broadcast over the tile.
        out_ref[0] = (jnp.zeros((c_dim, tv), jnp.float32)
                      + bc_ref[...]).astype(out_ref.dtype)

    @pl.when(nch > 0)
    def _():
        neg = jnp.asarray(-jnp.inf, dtype=acc_ref.dtype)
        acc_ref[...] = jnp.full(acc_ref.shape, neg, acc_ref.dtype)
        chunk0 = chunk0_ref[b, j]
        vids = j * tv + jax.lax.broadcasted_iota(jnp.int32, (tv, 1), 0)

        @pl.loop(0, nch)
        def _(c):
            chunk = chunk0 + c
            idx_c = idx_ref[0, chunk, :, :]                       # [1, pc]
            hid_c = hid_ref[0, chunk, :, :]                       # [H, pc]
            mask = vids == idx_c                                  # [tv, pc]
            masked = jnp.where(mask[:, None, :], hid_c[None, :, :], neg)
            acc_ref[...] = jnp.maximum(acc_ref[...], jnp.max(masked, axis=-1))

        acc = acc_ref[...].astype(jnp.float32)                    # [tv, H]
        # torch_scatter.scatter_max: voxels with no point are filled with 0.
        pooled = jnp.where(acc > jnp.float32(-3.0e38), acc, 0.0)
        out = jax.lax.dot_general(                                 # [C, tv]
            wc_ref[...], pooled, (((1,), (1,)), ((), ())),
            preferred_element_type=jnp.float32) + bc_ref[...]
        out_ref[0] = out.astype(out_ref.dtype)


# ----------------------------------------------------------------------------
# Tiling helpers
# ----------------------------------------------------------------------------
def _round_up(x, m):
    return ((x + m - 1) // m) * m


def _pick_tile(total, cap):
    """Largest multiple of 128 <= cap that divides total (else total itself)."""
    cand = (min(cap, total) // 128) * 128
    while cand >= 128:
        if total % cand == 0:
            return cand
        cand -= 128
    return total


def _tpu_vmem_capacity(default_bytes=64 << 20):
    try:
        return int(pltpu.get_tpu_info().vmem_capacity_bytes)
    except Exception:
        return default_bytes


# ----------------------------------------------------------------------------
# Wrapper
# ----------------------------------------------------------------------------
def local_pool_base_encoder(points, feature, params, *, grid_resolution,
                            padding=0.02, voxel_tile=None, point_chunk=128,
                            point_tile=2048, hidden_dtype=jnp.bfloat16):
    """Returns (index [N,1,P] int32, feature_grid [N, c_dim, reso, reso, reso])."""
    w0, b0, w1, b1, ws, wc, bc = params
    n, p, f_dim = feature.shape
    hidden_dim = ws.shape[1]
    c_dim = wc.shape[1]
    reso = grid_resolution
    v = reso ** 3

    vmem_cap = _tpu_vmem_capacity()
    pc = point_chunk
    assert pc > 0 and pc % 128 == 0
    if voxel_tile is None:
        voxel_tile = 512 if vmem_cap >= (96 << 20) else 256
    tv = _pick_tile(v, voxel_tile)
    assert v % tv == 0
    n_tiles = v // tv

    # --- glue: pad_and_crop_coordinate3d + coordinate3d_to_index (elementwise)
    coord = jnp.clip((points - 0.5) / (1.0 + padding) + 0.5, 0.0, 1.0 - 1e-6)
    xi = jnp.floor(coord * reso).astype(jnp.int32)
    index = xi[..., 0] + reso * (xi[..., 1] + reso * xi[..., 2])       # [N, P]

    # --- pad P to a multiple of the point chunk (sentinel voxel id -1)
    p_pad = _round_up(p, pc)
    if p_pad != p:
        index_p = jnp.concatenate(
            [index, jnp.full((n, p_pad - p), -1, jnp.int32)], axis=1)
        feat_p = jnp.concatenate(
            [feature, jnp.zeros((n, p_pad - p, f_dim), feature.dtype)], axis=1)
    else:
        index_p, feat_p = index, feature
    n_chunks = p_pad // pc
    tp = _pick_tile(p_pad, point_tile)

    # --- sort points by voxel tile; per-(batch, tile) chunk tables (plain JAX)
    tile_id = jnp.where(index_p >= 0, index_p // tv, n_tiles)          # [N, Pp]
    order = jnp.argsort(tile_id, axis=1)
    sorted_index = jnp.take_along_axis(index_p, order, axis=1)
    sorted_feat = jnp.take_along_axis(feat_p, order[..., None], axis=1)
    valid = (tile_id < n_tiles).astype(jnp.int32)
    batch_ix = jnp.arange(n, dtype=jnp.int32)[:, None]
    counts = jnp.zeros((n, n_tiles), jnp.int32).at[
        batch_ix, jnp.minimum(tile_id, n_tiles - 1)].add(valid)
    offsets = jnp.cumsum(counts, axis=1) - counts                      # exclusive
    chunk0 = (offsets // pc).astype(jnp.int32)
    nch = jnp.where(counts > 0,
                    (offsets + counts - chunk0 * pc + pc - 1) // pc,
                    0).astype(jnp.int32)

    # --- kernel-friendly layouts
    feat_t = jnp.transpose(sorted_feat, (0, 2, 1))           # [N, f_dim, Pp]
    idx_ck = sorted_index.reshape(n, n_chunks, 1, pc)        # free reshape
    w0t = w0.T                                                # [size_h, f_dim]
    wcat = jnp.concatenate([w1.T, ws.T], axis=1)              # [H, size_h+f_dim]
    wct = wc.T                                                # [c_dim, H]
    b0c = b0.reshape(-1, 1)
    bcat = b1.reshape(-1, 1)
    bcc = bc.reshape(-1, 1)
    hsz = jnp.dtype(hidden_dtype).itemsize

    # --- ResnetBlockFC: [N, f_dim, Pp] -> hidden chunk-major [N, Pp/pc, H, pc]
    resnet_vmem = int(min(vmem_cap, max(
        2 * (f_dim * tp * 4 + (tp // pc) * hidden_dim * pc * hsz)
        + 6 * hidden_dim * tp * 4 + (2 << 20),
        32 << 20)))
    hidden_ck = pl.pallas_call(
        _resnet_kernel,
        out_shape=jax.ShapeDtypeStruct((n, n_chunks, hidden_dim, pc),
                                       hidden_dtype),
        grid_spec=pltpu.PrefetchScalarGridSpec(
            num_scalar_prefetch=0,
            grid=(n, p_pad // tp),
            in_specs=[
                pl.BlockSpec((1, f_dim, tp), lambda i, k: (i, 0, k)),
                pl.BlockSpec(w0t.shape, lambda i, k: (0, 0)),
                pl.BlockSpec(b0c.shape, lambda i, k: (0, 0)),
                pl.BlockSpec(wcat.shape, lambda i, k: (0, 0)),
                pl.BlockSpec(bcat.shape, lambda i, k: (0, 0)),
            ],
            out_specs=pl.BlockSpec((1, tp // pc, hidden_dim, pc),
                                   lambda i, k: (i, k, 0, 0)),
        ),
        compiler_params=pltpu.CompilerParams(
            dimension_semantics=("parallel", "parallel"),
            vmem_limit_bytes=resnet_vmem),
    )(feat_t, w0t, b0c, wcat, bcat)

    # --- scatter_max pooling + conv_out, channel-major output [N, C, V]
    pool_vmem = int(min(vmem_cap, max(
        2 * (n_chunks * hidden_dim * pc * hsz + n_chunks * pc * 4)
        + 2 * c_dim * tv * 4
        + 2 * tv * hidden_dim * pc * hsz
        + 6 * tv * hidden_dim * 4 + (2 << 20),
        32 << 20)))
    # TODO(synk): single-buffer (pipeline_mode=pl.Buffered(1)) the j-invariant
    # idx/hidden blocks once buffer_count=1 is reliably supported.
    grid_cv = pl.pallas_call(
        _pool_conv_kernel,
        out_shape=jax.ShapeDtypeStruct((n, c_dim, v), jnp.float32),
        grid_spec=pltpu.PrefetchScalarGridSpec(
            num_scalar_prefetch=2,
            grid=(n, n_tiles),
            in_specs=[
                pl.BlockSpec((1, n_chunks, 1, pc),
                             lambda i, j, c0, nc: (i, 0, 0, 0)),
                pl.BlockSpec((1, n_chunks, hidden_dim, pc),
                             lambda i, j, c0, nc: (i, 0, 0, 0)),
                pl.BlockSpec(wct.shape, lambda i, j, c0, nc: (0, 0)),
                pl.BlockSpec(bcc.shape, lambda i, j, c0, nc: (0, 0)),
            ],
            out_specs=pl.BlockSpec((1, c_dim, tv),
                                   lambda i, j, c0, nc: (i, 0, j)),
            scratch_shapes=[pltpu.VMEM((tv, hidden_dim), hidden_dtype)],
        ),
        compiler_params=pltpu.CompilerParams(
            dimension_semantics=("parallel", "parallel"),
            vmem_limit_bytes=pool_vmem),
    )(chunk0, nch, idx_ck, hidden_ck, wct, bcc)

    # [N, C, V] -> [N, C, reso, reso, reso]: pure reshape, no transpose pass.
    feature_grid = grid_cv.reshape(n, c_dim, reso, reso, reso)
    return index[:, None, :], feature_grid


# ----------------------------------------------------------------------------
# Pure-JAX reference (for correctness check)
# ----------------------------------------------------------------------------
def reference_forward(points, feature, params, *, grid_resolution, padding,
                      hidden_dtype=jnp.float32):
    w0, b0, w1, b1, ws, wc, bc = params
    n, p, _ = feature.shape
    reso = grid_resolution
    v = reso ** 3
    hi = jax.lax.Precision.HIGHEST

    coord = jnp.clip((points - 0.5) / (1.0 + padding) + 0.5, 0.0, 1.0 - 1e-6)
    xi = jnp.floor(coord * reso).astype(jnp.int32)
    index = xi[..., 0] + reso * (xi[..., 1] + reso * xi[..., 2])        # [N,P]

    x = feature
    xr = jnp.maximum(x, 0.0)
    net = jnp.maximum(jnp.dot(xr, w0, precision=hi) + b0, 0.0)
    dx = jnp.dot(net, w1, precision=hi) + b1
    h = jnp.dot(x, ws, precision=hi) + dx                               # [N,P,H]
    h = h.astype(hidden_dtype).astype(jnp.float32)

    neg = jnp.float32(-jnp.inf)
    onehot = index[:, :, None] == jnp.arange(v, dtype=jnp.int32)[None, None, :]
    occupied = jnp.any(onehot, axis=1)                                  # [N,V]
    pooled = jnp.max(
        jnp.where(onehot[..., None], h[:, :, None, :], neg), axis=1)    # [N,V,H]
    pooled = jnp.where(occupied[..., None], pooled, 0.0)

    grid = jnp.dot(pooled, wc, precision=hi) + bc                       # [N,V,C]
    c_dim = wc.shape[1]
    grid = grid.reshape(n, reso, reso, reso, c_dim).transpose(0, 4, 1, 2, 3)
    return index[:, None, :], grid


# ----------------------------------------------------------------------------
if __name__ == "__main__":
    N, P = 2, 250                       # P not a multiple of 128 -> exercises padding
    F_DIM, HIDDEN_DIM, C_DIM = 8, 32, 16
    RESO, PADDING = 8, 0.02
    SIZE_H = min(F_DIM, HIDDEN_DIM)     # ResnetBlockFC hidden size

    key = jax.random.PRNGKey(0)
    ks = jax.random.split(key, 9)

    points = jax.random.uniform(ks[0], (N, P, 3), dtype=jnp.float32)    # ~[0,1]
    # Batch 1 only occupies the low corner of the cube so some voxel tiles are
    # empty (exercises the scalar-prefetched nch == 0 skip path).
    points = points.at[1].multiply(0.4)
    feature = jax.random.normal(ks[1], (N, P, F_DIM), dtype=jnp.float32)

    # Deterministic synthetic parameters (real module zero-inits fc_1.weight;
    # random values here so the full matmul path is exercised).
    w0 = jax.random.normal(ks[2], (F_DIM, SIZE_H), jnp.float32) * (F_DIM ** -0.5)
    b0 = jax.random.normal(ks[3], (SIZE_H,), jnp.float32) * 0.1
    w1 = jax.random.normal(ks[4], (SIZE_H, HIDDEN_DIM), jnp.float32) * (SIZE_H ** -0.5)
    b1 = jax.random.normal(ks[5], (HIDDEN_DIM,), jnp.float32) * 0.1
    ws = jax.random.normal(ks[6], (F_DIM, HIDDEN_DIM), jnp.float32) * (F_DIM ** -0.5)
    # Conv3d(hidden, c_dim, 1): weight [c_dim, hidden, 1,1,1] stored as [hidden, c_dim]
    wc = jax.random.normal(ks[7], (HIDDEN_DIM, C_DIM), jnp.float32) * (HIDDEN_DIM ** -0.5)
    bc = jax.random.normal(ks[8], (C_DIM,), jnp.float32) * 0.1
    params = (w0, b0, w1, b1, ws, wc, bc)

    # --- f32-hidden path (tight numerics check of the sorted-scan algorithm)
    idx32, grid32 = local_pool_base_encoder(
        points, feature, params, grid_resolution=RESO, padding=PADDING,
        voxel_tile=128, point_tile=128, hidden_dtype=jnp.float32)
    jax.block_until_ready((idx32, grid32))
    assert idx32.shape == (N, 1, P) and idx32.dtype == jnp.int32
    assert grid32.shape == (N, C_DIM, RESO, RESO, RESO)

    ref_idx, ref_g32 = reference_forward(
        points, feature, params, grid_resolution=RESO, padding=PADDING,
        hidden_dtype=jnp.float32)
    assert bool(jnp.all(idx32 == ref_idx))
    assert bool(jnp.allclose(grid32, ref_g32, rtol=2e-3, atol=2e-3)), (
        float(jnp.max(jnp.abs(grid32 - ref_g32))))

    # --- bf16-hidden fast path (the perf-default configuration)
    idx16, grid16 = local_pool_base_encoder(
        points, feature, params, grid_resolution=RESO, padding=PADDING,
        hidden_dtype=jnp.bfloat16)
    jax.block_until_ready((idx16, grid16))
    _, ref_g16 = reference_forward(
        points, feature, params, grid_resolution=RESO, padding=PADDING,
        hidden_dtype=jnp.bfloat16)
    assert bool(jnp.all(idx16 == ref_idx))
    assert bool(jnp.allclose(grid16, ref_g16, rtol=1.5e-2, atol=1.5e-2)), (
        float(jnp.max(jnp.abs(grid16 - ref_g16))))

    print("KERNEL_OK")
</pallas_src>

<mosaic_0001>
module attributes {stable_mosaic.version = 11 : i64} {
  func.func @_resnet_kernel(%arg0: i32, %arg1: i32, %arg2: memref<1x8x128xf32, #tpu.memory_space<vmem>>, %arg3: memref<8x8xf32, #tpu.memory_space<vmem>>, %arg4: memref<8x1xf32, #tpu.memory_space<vmem>>, %arg5: memref<32x16xf32, #tpu.memory_space<vmem>>, %arg6: memref<32x1xf32, #tpu.memory_space<vmem>>, %arg7: memref<1x1x32x128xf32, #tpu.memory_space<vmem>>) attributes {dimension_semantics = [#tpu.dimension_semantics<parallel>, #tpu.dimension_semantics<parallel>], iteration_bounds = array<i64: 2, 2>, scalar_prefetch = 0 : i64, scratch_operands = 0 : i64, tpu.core_type = #tpu.core_type<tc>, window_params = [{transform_indices = @transform_0, window_bounds = array<i64: 1, 8, 128>}, {pipeline_mode = #tpu.pipeline_mode<synchronous>, transform_indices = @transform_1, window_bounds = array<i64: 8, 8>}, {pipeline_mode = #tpu.pipeline_mode<synchronous>, transform_indices = @transform_2, window_bounds = array<i64: 8, 1>}, {pipeline_mode = #tpu.pipeline_mode<synchronous>, transform_indices = @transform_3, window_bounds = array<i64: 32, 16>}, {pipeline_mode = #tpu.pipeline_mode<synchronous>, transform_indices = @transform_4, window_bounds = array<i64: 32, 1>}, {transform_indices = @transform_5, window_bounds = array<i64: 1, 1, 32, 128>}]} {
    %c0 = arith.constant 0 : index
    %c0_0 = arith.constant 0 : index
    %c0_1 = arith.constant 0 : index
    %0 = vector.load %arg2[%c0, %c0_0, %c0_1] : memref<1x8x128xf32, #tpu.memory_space<vmem>>, vector<1x8x128xf32>
    %1 = vector.shape_cast %0 : vector<1x8x128xf32> to vector<8x128xf32>
    %cst = arith.constant 0.000000e+00 : f32
    %2 = vector.broadcast %cst : f32 to vector<8x128xf32>
    %3 = arith.maximumf %1, %2 : vector<8x128xf32>
    %c0_2 = arith.constant 0 : index
    %c0_3 = arith.constant 0 : index
    %4 = vector.load %arg3[%c0_2, %c0_3] : memref<8x8xf32, #tpu.memory_space<vmem>>, vector<8x8xf32>
    %cst_4 = arith.constant dense<0.000000e+00> : vector<8x128xf32>
    %5 = tpu.matmul %4, %3, %cst_4 {dimension_numbers = #tpu.dot_dimension_numbers<[1], [0], [0], [1], [0, 0, 1, 1], [], []>} : vector<8x8xf32>, vector<8x128xf32>, vector<8x128xf32> -> vector<8x128xf32>
    %c0_5 = arith.constant 0 : index
    %c0_6 = arith.constant 0 : index
    %6 = vector.load %arg4[%c0_5, %c0_6] : memref<8x1xf32, #tpu.memory_space<vmem>>, vector<8x1xf32>
    %7 = vector.broadcast %6 : vector<8x1xf32> to vector<8x128xf32>
    %8 = arith.addf %5, %7 : vector<8x128xf32>
    %cst_7 = arith.constant 0.000000e+00 : f32
    %9 = vector.broadcast %cst_7 : f32 to vector<8x128xf32>
    %10 = arith.maximumf %8, %9 : vector<8x128xf32>
    %11 = tpu.concatenate %10, %1 in 0 : vector<8x128xf32>, vector<8x128xf32> -> vector<16x128xf32>
    %c0_8 = arith.constant 0 : index
    %c0_9 = arith.constant 0 : index
    %12 = vector.load %arg5[%c0_8, %c0_9] : memref<32x16xf32, #tpu.memory_space<vmem>>, vector<32x16xf32>
    %cst_10 = arith.constant dense<0.000000e+00> : vector<32x128xf32>
    %13 = tpu.matmul %12, %11, %cst_10 {dimension_numbers = #tpu.dot_dimension_numbers<[1], [0], [0], [1], [0, 0, 1, 1], [], []>} : vector<32x16xf32>, vector<16x128xf32>, vector<32x128xf32> -> vector<32x128xf32>
    %c0_11 = arith.constant 0 : index
    %c0_12 = arith.constant 0 : index
    %14 = vector.load %arg6[%c0_11, %c0_12] : memref<32x1xf32, #tpu.memory_space<vmem>>, vector<32x1xf32>
    %15 = vector.broadcast %14 : vector<32x1xf32> to vector<32x128xf32>
    %16 = arith.addf %13, %15 : vector<32x128xf32>
    %c0_13 = arith.constant 0 : index
    %c0_14 = arith.constant 0 : index
    %c0_15 = arith.constant 0 : index
    %c0_16 = arith.constant 0 : index
    %17 = vector.load %arg7[%c0_13, %c0_14, %c0_15, %c0_16] : memref<1x1x32x128xf32, #tpu.memory_space<vmem>>, vector<1x1x32x128xf32>
    %18 = vector.shape_cast %17 : vector<1x1x32x128xf32> to vector<32x128xf32>
    %19 = vector.shape_cast %16 : vector<32x128xf32> to vector<1x1x32x128xf32>
    tpu.vector_store %arg7[%c0_13, %c0_14, %c0_15, %c0_16], %19 {strides = array<i32>} : memref<1x1x32x128xf32, #tpu.memory_space<vmem>>, vector<1x1x32x128xf32>,
    return
  }
  func.func @transform_0(%arg0: i32, %arg1: i32) -> (i32, i32, i32) {
    %c0_i32 = arith.constant 0 : i32
    %c0_i32_0 = arith.constant 0 : i32
    return %arg0, %c0_i32, %arg1 : i32, i32, i32
  }
  func.func @transform_1(%arg0: i32, %arg1: i32) -> (i32, i32) {
    %c0_i32 = arith.constant 0 : i32
    %c0_i32_0 = arith.constant 0 : i32
    %c0_i32_1 = arith.constant 0 : i32
    return %c0_i32, %c0_i32_0 : i32, i32
  }
  func.func @transform_2(%arg0: i32, %arg1: i32) -> (i32, i32) {
    %c0_i32 = arith.constant 0 : i32
    %c0_i32_0 = arith.constant 0 : i32
    %c0_i32_1 = arith.constant 0 : i32
    return %c0_i32, %c0_i32_0 : i32, i32
  }
  func.func @transform_3(%arg0: i32, %arg1: i32) -> (i32, i32) {
    %c0_i32 = arith.constant 0 : i32
    %c0_i32_0 = arith.constant 0 : i32
    %c0_i32_1 = arith.constant 0 : i32
    return %c0_i32, %c0_i32_0 : i32, i32
  }
  func.func @transform_4(%arg0: i32, %arg1: i32) -> (i32, i32) {
    %c0_i32 = arith.constant 0 : i32
    %c0_i32_0 = arith.constant 0 : i32
    %c0_i32_1 = arith.constant 0 : i32
    return %c0_i32, %c0_i32_0 : i32, i32
  }
  func.func @transform_5(%arg0: i32, %arg1: i32) -> (i32, i32, i32, i32) {
    %c0_i32 = arith.constant 0 : i32
    %c0_i32_0 = arith.constant 0 : i32
    %c0_i32_1 = arith.constant 0 : i32
    return %arg0, %arg1, %c0_i32, %c0_i32_0 : i32, i32, i32, i32
  }
}

</mosaic_0001>

<llo_original>
// kernel: tpu_custom_call.1
$region0: #{tpu_custom_call.1}
  #allocation0 [shape = 'u32[]', space=smem, size = 0x4, offset = 0x4, fixed_abs, tag = 'smem constant byte address 0x4 - core index']
  #allocation1 [shape = 'u32[144,128]{1,0:T(1,128)}', space=vmem, size = 0x12000, scoped, tag = 'internal scratch']
  %s0 = inlined_call_operand.vmem [shape: f32[2,8,256], index: 0, kind: input, shape index: {}]
  %s1 = inlined_call_operand.vmem [shape: f32[8,8], index: 1, kind: input, shape index: {}]
  %s2 = inlined_call_operand.vmem [shape: f32[8,1], index: 2, kind: input, shape index: {}]
  %s3 = inlined_call_operand.vmem [shape: f32[32,16], index: 3, kind: input, shape index: {}]
  %s4 = inlined_call_operand.vmem [shape: f32[32,1], index: 4, kind: input, shape index: {}]
  %s5 = inlined_call_operand.hbm [shape: f32[2,2,32,128], index: 5, kind: output, shape index: {}]
  %s6 = sld [smem:[#allocation0]]
  $region53: #{tpu_custom_call.1} parent=0
    _
  %s8 = ssub.s32 1, %s6
  %s9 = scalar_select 0, %s8, %s6
  $region1: #{tpu_custom_call.1} parent=0
    #allocation2 [shape = 'u8[32768]{0}', space=vmem, size = 0x8000, scoped, tag = 'output window, operand 0']
    #allocation3 [shape = 's32[2]{0}', space=sflag, size = 0x8, scoped, tag = 'scoped memory for tpu_custom_call.1']
    %10 = vsyncpa [#allocation3], 0
    %s11 = scalar_lea.sflag [#allocation3], 1
    %12 = vsyncpa %s11, 0
    loop: start=0, step=1, limit=6
    $region2: #{tpu_custom_call.1} parent=1 // loop_pre_header
      _
    $region3: #{tpu_custom_call.1} parent=1 // loop_header
      %s14 = sphi 0, %s18
      %p15 = scmp.ge.s32.totalorder %s14, 6
      %s21 = sphi 0, %s33
      %s22 = sphi 0, %s29
      %s23 = sphi 0, %s21
      %s24 = sphi 0, %s22
      %s25 = sphi 0, %s23
      %s26 = sphi 0, %s24
      %s38 = sphi 0, %s40
      %s41 = sphi 0, %s38
      %s42 = sphi 0, %s41
      %s58 = sphi 0, %s42
      %s62 = sphi 0, %s62
      %s64 = sphi 0, %s62
      %s65 = sphi 0, %s64
      %s79 = sphi 0, %s65
      %s83 = sphi 0, %s83
      %s85 = sphi 0, %s83
      %s86 = sphi 0, %s85
      %s100 = sphi 0, %s86
      %s104 = sphi 0, %s104
      %s106 = sphi 0, %s104
      %s107 = sphi 0, %s106
      %s121 = sphi 0, %s107
      %s125 = sphi 0, %s125
      %s127 = sphi 0, %s125
      %s128 = sphi 0, %s127
      %s142 = sphi 0, %s128
      %s150 = sphi 0, %s152
      %s153 = sphi 0, %s150
      %s154 = sphi 0, %s153
      %s170 = sphi 0, %s154
    $region4: #{tpu_custom_call.1} parent=1 // loop_header_branch
      %17 = sbr.rel (%p15) target = $region8
    $region5: #{tpu_custom_call.1} parent=1 // loop_body
      %s19 = ssub.s32 %s14, 1
      %s20 = ssub.s32 %s14, 2
      %s27 = sadd.s32 1, %s22
      %p28 = scmp.ge.s32.totalorder %s27, 2
      %s29 = scalar_select %p28, 0, %s27
      %s30 = sadd.s32 1, %s21
      %s31 = scalar_select %p28, %s30, %s21
      %p32 = scmp.ge.s32.totalorder %s31, 2
      %s33 = scalar_select %p32, 0, %s31
      %s34 = ssub.s32 %s21, %s33
      %s35 = ssub.s32 %s22, %s29
      %s36 = sor.u32 %s34, %s35
      %p37 = scmp.eq.s32.totalorder %s36, 0
      %s39 = sadd.s32 %s38, 1
      %s40 = scalar_select %p37, %s38, %s39
      %p43 = pneg %p37
      %p44 = scmp.eq.s32.totalorder %s14, 3
      %p45 = por %p43, %p44
      %p46 = scmp.ne.s32.totalorder %s38, %s41
      %p47 = scmp.eq.s32.totalorder %s14, 0
      %p48 = por %p46, %p47
      %p49 = scmp.ne.s32.totalorder %s38, %s41
      %p50 = scmp.eq.s32.totalorder %s19, 3
      %p51 = por %p49, %p50
      %p52 = scmp.ne.s32.totalorder %s41, %s42
      %p53 = scmp.eq.s32.totalorder %s19, 0
      %p54 = por %p52, %p53
      %p55 = scmp.ne.s32.totalorder %s41, %s42
      %p56 = scmp.eq.s32.totalorder %s20, 3
      %p57 = por %p55, %p56
      %p59 = scmp.ne.s32.totalorder %s42, %s58
      %p60 = scmp.eq.s32.totalorder %s20, 0
      %p61 = por %p59, %p60
      %s63 = sadd.s32 %s62, 1
      %p66 = scmp.eq.s32.totalorder %s14, 3
      %p67 = scmp.ne.s32.totalorder %s62, %s64
      %p68 = scmp.eq.s32.totalorder %s14, 0
      %p69 = por %p67, %p68
      %p70 = scmp.ne.s32.totalorder %s62, %s64
      %p71 = scmp.eq.s32.totalorder %s19, 3
      %p72 = por %p70, %p71
      %p73 = scmp.ne.s32.totalorder %s64, %s65
      %p74 = scmp.eq.s32.totalorder %s19, 0
      %p75 = por %p73, %p74
      %p76 = scmp.ne.s32.totalorder %s64, %s65
      %p77 = scmp.eq.s32.totalorder %s20, 3
      %p78 = por %p76, %p77
      %p80 = scmp.ne.s32.totalorder %s65, %s79
      %p81 = scmp.eq.s32.totalorder %s20, 0
      %p82 = por %p80, %p81
      %s84 = sadd.s32 %s83, 1
      %p87 = scmp.eq.s32.totalorder %s14, 3
      %p88 = scmp.ne.s32.totalorder %s83, %s85
      %p89 = scmp.eq.s32.totalorder %s14, 0
      %p90 = por %p88, %p89
      %p91 = scmp.ne.s32.totalorder %s83, %s85
      %p92 = scmp.eq.s32.totalorder %s19, 3
      %p93 = por %p91, %p92
      %p94 = scmp.ne.s32.totalorder %s85, %s86
      %p95 = scmp.eq.s32.totalorder %s19, 0
      %p96 = por %p94, %p95
      %p97 = scmp.ne.s32.totalorder %s85, %s86
      %p98 = scmp.eq.s32.totalorder %s20, 3
      %p99 = por %p97, %p98
      %p101 = scmp.ne.s32.totalorder %s86, %s100
      %p102 = scmp.eq.s32.totalorder %s20, 0
      %p103 = por %p101, %p102
      %s105 = sadd.s32 %s104, 1
      %p108 = scmp.eq.s32.totalorder %s14, 3
      %p109 = scmp.ne.s32.totalorder %s104, %s106
      %p110 = scmp.eq.s32.totalorder %s14, 0
      %p111 = por %p109, %p110
      %p112 = scmp.ne.s32.totalorder %s104, %s106
      %p113 = scmp.eq.s32.totalorder %s19, 3
      %p114 = por %p112, %p113
      %p115 = scmp.ne.s32.totalorder %s106, %s107
      %p116 = scmp.eq.s32.totalorder %s19, 0
      %p117 = por %p115, %p116
      %p118 = scmp.ne.s32.totalorder %s106, %s107
      %p119 = scmp.eq.s32.totalorder %s20, 3
      %p120 = por %p118, %p119
      %p122 = scmp.ne.s32.totalorder %s107, %s121
      %p123 = scmp.eq.s32.totalorder %s20, 0
      %p124 = por %p122, %p123
      %s126 = sadd.s32 %s125, 1
      %p129 = scmp.eq.s32.totalorder %s14, 3
      %p130 = scmp.ne.s32.totalorder %s125, %s127
      %p131 = scmp.eq.s32.totalorder %s14, 0
      %p132 = por %p130, %p131
      %p133 = scmp.ne.s32.totalorder %s125, %s127
      %p134 = scmp.eq.s32.totalorder %s19, 3
      %p135 = por %p133, %p134
      %p136 = scmp.ne.s32.totalorder %s127, %s128
      %p137 = scmp.eq.s32.totalorder %s19, 0
      %p138 = por %p136, %p137
      %p139 = scmp.ne.s32.totalorder %s127, %s128
      %p140 = scmp.eq.s32.totalorder %s20, 3
      %p141 = por %p139, %p140
      %p143 = scmp.ne.s32.totalorder %s128, %s142
      %p144 = scmp.eq.s32.totalorder %s20, 0
      %p145 = por %p143, %p144
      %s146 = ssub.s32 %s21, %s33
      %s147 = ssub.s32 %s22, %s29
      %s148 = sor.u32 %s146, %s147
      %p149 = scmp.eq.s32.totalorder %s148, 0
      %s151 = sadd.s32 %s150, 1
      %s152 = scalar_select %p149, %s150, %s151
      %p155 = pneg %p149
      %p156 = scmp.eq.s32.totalorder %s14, 3
      %p157 = por %p155, %p156
      %p158 = scmp.ne.s32.totalorder %s150, %s153
      %p159 = scmp.eq.s32.totalorder %s14, 0
      %p160 = por %p158, %p159
      %p161 = scmp.ne.s32.totalorder %s150, %s153
      %p162 = scmp.eq.s32.totalorder %s19, 3
      %p163 = por %p161, %p162
      %p164 = scmp.ne.s32.totalorder %s153, %s154
      %p165 = scmp.eq.s32.totalorder %s19, 0
      %p166 = por %p164, %p165
      %p167 = scmp.ne.s32.totalorder %s153, %s154
      %p168 = scmp.eq.s32.totalorder %s20, 3
      %p169 = por %p167, %p168
      %p171 = scmp.ne.s32.totalorder %s154, %s170
      %p172 = scmp.eq.s32.totalorder %s20, 0
      %p173 = por %p171, %p172
      %p174 = scmp.le.s32.totalorder 1, %s14
      %p175 = scmp.lt.s32.totalorder %s14, 5
      %p176 = pnand %p174, %p175
      %p177 = pneg %p176
      // Predicated region
      $region9: #{tpu_custom_call.1} parent=5 // pred_check
        _
      $region10: #{tpu_custom_call.1} parent=5 // pred_check_branch
        %179 = sbr.rel (%p176) target = $region12
      $region11: #{tpu_custom_call.1} parent=5 // pred_region
        %s180 = ssub.s32 %s14, 1
        // Predicated region
        $region13: #{tpu_custom_call.1} parent=11 // pred_check
          %p181 = pneg %p75
        $region14: #{tpu_custom_call.1} parent=11 // pred_check_branch
          %183 = sbr.rel (%p181) target = $region16
        $region15: #{tpu_custom_call.1} parent=11 // pred_region
          _
        $region16: #{tpu_custom_call.1} parent=11 // pred_fallthru
          _
        // Predicated region
        $region17: #{tpu_custom_call.1} parent=11 // pred_check
          %p184 = pneg %p96
        $region18: #{tpu_custom_call.1} parent=11 // pred_check_branch
          %186 = sbr.rel (%p184) target = $region20
        $region19: #{tpu_custom_call.1} parent=11 // pred_region
          _
        $region20: #{tpu_custom_call.1} parent=11 // pred_fallthru
          _
        // Predicated region
        $region21: #{tpu_custom_call.1} parent=11 // pred_check
          %p187 = pneg %p117
        $region22: #{tpu_custom_call.1} parent=11 // pred_check_branch
          %189 = sbr.rel (%p187) target = $region24
        $region23: #{tpu_custom_call.1} parent=11 // pred_region
          _
        $region24: #{tpu_custom_call.1} parent=11 // pred_fallthru
          _
        // Predicated region
        $region25: #{tpu_custom_call.1} parent=11 // pred_check
          %p190 = pneg %p138
        $region26: #{tpu_custom_call.1} parent=11 // pred_check_branch
          %192 = sbr.rel (%p190) target = $region28
        $region27: #{tpu_custom_call.1} parent=11 // pred_region
          _
        $region28: #{tpu_custom_call.1} parent=11 // pred_fallthru
          _
      $region12: #{tpu_custom_call.1} parent=5 // pred_fallthru
        _
      %p193 = scmp.lt.s32.totalorder %s14, 4
      // Predicated region
      $region29: #{tpu_custom_call.1} parent=5 // pred_check
        %p194 = pneg %p193
      $region30: #{tpu_custom_call.1} parent=5 // pred_check_branch
        %196 = sbr.rel (%p194) target = $region32
      $region31: #{tpu_custom_call.1} parent=5 // pred_region
        // Predicated region
        $region33: #{tpu_custom_call.1} parent=31 // pred_check
          %p197 = pneg %p48
        $region34: #{tpu_custom_call.1} parent=31 // pred_check_branch
          %199 = sbr.rel (%p197) target = $region36
        $region35: #{tpu_custom_call.1} parent=31 // pred_region
          %p200 = scmp.lt.s32.totalorder %s21, 1
          %s201 = scalar_select %p200, %s21, 1
          %p202 = scmp.lt.s32.totalorder %s22, 1
          %s203 = scalar_select %p202, %s22, 1
          %s204 = smul.addr %s201, 2
          %s205 = sadd.s32 %s203, %s204
          %s206 = smul.addr %s205, 8
          %s207 = scalar_lea.vmem %s0, %s206
        $region36: #{tpu_custom_call.1} parent=31 // pred_fallthru
          _
      $region32: #{tpu_custom_call.1} parent=5 // pred_fallthru
        _
      %p208 = scmp.le.s32.totalorder 1, %s14
      %p209 = scmp.lt.s32.totalorder %s14, 5
      %p210 = pnand %p208, %p209
      %p211 = pneg %p210
      // Predicated region
      $region37: #{tpu_custom_call.1} parent=5 // pred_check
        _
      $region38: #{tpu_custom_call.1} parent=5 // pred_check_branch
        %213 = sbr.rel (%p210) target = $region40
      $region39: #{tpu_custom_call.1} parent=5 // pred_region
        %s214 = ssub.s32 %s14, 1
        %p215 = scmp.lt.s32.totalorder %s23, 1
        %s216 = scalar_select %p215, %s23, 1
        %p217 = scmp.lt.s32.totalorder %s24, 1
        %s218 = scalar_select %p217, %s24, 1
        %s219 = smul.addr %s216, 2
        %s220 = sadd.s32 %s218, %s219
        %s221 = smul.addr %s220, 8
        %s222 = scalar_lea.vmem %s0, %s221
        %p223 = pneg %p54
        %p224 = pneg %p51
        %p225 = pneg %p75
        %p226 = pneg %p72
        %p227 = pneg %p96
        %p228 = pneg %p93
        %p229 = pneg %p117
        %p230 = pneg %p114
        %p231 = pneg %p138
        %p232 = pneg %p135
        %p233 = pneg %p166
        %p234 = pneg %p163
        %s235 = sand.u32 %s153, 1
        %s236 = scalar_lea.sflag [#allocation3], %s235
        %s237 = sand.u32 %s153, 1
        %s238 = smul.addr %s237, 32
        %s239 = scalar_lea.vmem [#allocation2], %s238
        %p240 = scmp.lt.s32.totalorder %s23, 1
        %s241 = scalar_select %p240, %s23, 1
        %p242 = scmp.lt.s32.totalorder %s24, 1
        %s243 = scalar_select %p242, %s24, 1
        %s244 = smul.addr %s241, 2
        %s245 = sadd.s32 %s243, %s244
        %s246 = smul.addr %s245, 8
        %s247 = scalar_lea.vmem %s0, %s246
        %v248 = vld [vmem:[%s247] sm:$0xff]
        %v249 = vmax.f32 %v248, 0.0
        %v250 = vld [vmem:[%s1] sm:$0xff]
        %v251 = vld [vmem:[%s2] sm:$0xff]
        %253 = vset.pattern.permute.xlu0 0
        %254 = vperm.xlu0 %253, %v251
        %v255 = vpop.permute.xlu0 %254
        %vm257 = vcmask 64512
        %v259 = vsel %vm257, %v250, 0
        %261 = vmatprep.subr.mxu0 0.0
        %262 = vmatpush1.msra.mxu0 %v249
        %263 = vmatprep.subr.mxu0 0.0
        %264 = vmatpush1.msra.mxu0 0.0
        %265 = vmatprep.subr.mxu0 0.0
        %266 = vmatpush1.msra.mxu0 0.0
        %267 = vmatprep.subr.mxu0 0.0
        %268 = vmatpush1.msra.mxu0 0.0
        %269 = vmatprep.subr.mxu0 0.0
        %270 = vmatpush1.msra.mxu0 0.0
        %271 = vmatprep.subr.mxu0 0.0
        %272 = vmatpush1.msra.mxu0 0.0
        %273 = vmatprep.subr.mxu0 0.0
        %274 = vmatpush1.msra.mxu0 0.0
        %275 = vmatprep.subr.mxu0 0.0
        %276 = vmatpush1.msra.mxu0 0.0
        %277 = vmatprep.subr.mxu0 0.0
        %278 = vmatpush1.msra.mxu0 0.0
        %279 = vmatprep.subr.mxu0 0.0
        %280 = vmatpush1.msra.mxu0 0.0
        %281 = vmatprep.subr.mxu0 0.0
        %282 = vmatpush1.msra.mxu0 0.0
        %283 = vmatprep.subr.mxu0 0.0
        %284 = vmatpush1.msra.mxu0 0.0
        %285 = vmatprep.subr.mxu0 0.0
        %286 = vmatpush1.msra.mxu0 0.0
        %287 = vmatprep.subr.mxu0 0.0
        %288 = vmatpush1.msra.mxu0 0.0
        %289 = vmatprep.subr.mxu0 0.0
        %290 = vmatpush1.msra.mxu0 0.0
        %291 = vmatprep.subr.mxu0 0.0
        %292 = vmatpush1.msra.mxu0 0.0
        %293 = vmatprep.subr.mxu0 0.0
        %294 = vmatpush1.msra.mxu0 0.0
        %295 = vmatprep.subr.mxu0 0.0
        %296 = vmatpush1.msra.mxu0 0.0
        %297 = vmatprep.subr.mxu0 0.0
        %298 = vmatpush1.msra.mxu0 0.0
        %299 = vmatprep.subr.mxu0 0.0
        %300 = vmatpush1.msra.mxu0 0.0
        %301 = vmatprep.subr.mxu0 0.0
        %302 = vmatpush1.msra.mxu0 0.0
        %303 = vmatprep.subr.mxu0 0.0
        %304 = vmatpush1.msra.mxu0 0.0
        %305 = vmatprep.subr.mxu0 0.0
        %306 = vmatpush1.msra.mxu0 0.0
        %307 = vmatprep.subr.mxu0 0.0
        %308 = vmatpush1.msra.mxu0 0.0
        %309 = vmatprep.subr.mxu0 0.0
        %310 = vmatpush1.msra.mxu0 0.0
        %311 = vmatprep.subr.mxu0 0.0
        %312 = vmatpush1.msra.mxu0 0.0
        %313 = vmatprep.subr.mxu0 0.0
        %314 = vmatpush1.msra.mxu0 0.0
        %315 = vmatprep.subr.mxu0 0.0
        %316 = vmatpush1.msra.mxu0 0.0
        %317 = vmatprep.subr.mxu0 0.0
        %318 = vmatpush1.msra.mxu0 0.0
        %319 = vmatprep.subr.mxu0 0.0
        %320 = vmatpush1.msra.mxu0 0.0
        %321 = vmatprep.subr.mxu0 0.0
        %322 = vmatpush1.msra.mxu0 0.0
        %323 = vmatprep.subr.mxu0 0.0
        %324 = vmatpush1.msra.mxu0 0.0
        %325 = vmatprep.mubr.f32.mxu0 0.0
        %326 = vmatmul.mubr.f32.gmra.mrb[0].mxu0 %v259
        %v327 = vpop.f32.mrb[0].mxu0
        %v328 = vadd.f32 %v255, %v327
        %v329 = vpop.f32.mrb[0].mxu0
        %330 = vdwg.mxu0
        %v331 = vmax.f32 %v328, 0.0
        %v332 = vld [vmem:[%s3] sm:$0xff]
        %v333 = vld [vmem:[%s3 + $0x8] sm:$0xff]
        %v334 = vld [vmem:[%s3 + $0x10] sm:$0xff]
        %v335 = vld [vmem:[%s3 + $0x18] sm:$0xff]
        %v336 = vld [vmem:[%s4] sm:$0xff]
        %v337 = vld [vmem:[%s4 + $0x8] sm:$0xff]
        %v338 = vld [vmem:[%s4 + $0x10] sm:$0xff]
        %v339 = vld [vmem:[%s4 + $0x18] sm:$0xff]
        %341 = vset.pattern.permute.xlu0 0
        %342 = vperm.xlu0 %341, %v336
        %v343 = vpop.permute.xlu0 %342
        %346 = vset.pattern.permute.xlu0 0
        %347 = vperm.xlu0 %346, %v337
        %v348 = vpop.permute.xlu0 %347
        %351 = vset.pattern.permute.xlu0 0
        %352 = vperm.xlu0 %351, %v338
        %v353 = vpop.permute.xlu0 %352
        %356 = vset.pattern.permute.xlu0 0
        %357 = vperm.xlu0 %356, %v339
        %v358 = vpop.permute.xlu0 %357
        %vm360 = vcmask 130048
        %v362 = vsel %vm360, %v332, 0
        %v365 = vsel %vm360, %v333, 0
        %v368 = vsel %vm360, %v334, 0
        %v371 = vsel %vm360, %v335, 0
        %373 = vmatprep.subr.mxu0 0.0
        %374 = vmatpush1.msra.mxu0 %v331
        %375 = vmatprep.subr.mxu0 0.0
        %376 = vmatpush1.msra.mxu0 %v248
        %377 = vmatprep.subr.mxu0 0.0
        %378 = vmatpush1.msra.mxu0 0.0
        %379 = vmatprep.subr.mxu0 0.0
        %380 = vmatpush1.msra.mxu0 0.0
        %381 = vmatprep.subr.mxu0 0.0
        %382 = vmatpush1.msra.mxu0 0.0
        %383 = vmatprep.subr.mxu0 0.0
        %384 = vmatpush1.msra.mxu0 0.0
        %385 = vmatprep.subr.mxu0 0.0
        %386 = vmatpush1.msra.mxu0 0.0
        %387 = vmatprep.subr.mxu0 0.0
        %388 = vmatpush1.msra.mxu0 0.0
        %389 = vmatprep.subr.mxu0 0.0
        %390 = vmatpush1.msra.mxu0 0.0
        %391 = vmatprep.subr.mxu0 0.0
        %392 = vmatpush1.msra.mxu0 0.0
        %393 = vmatprep.subr.mxu0 0.0
        %394 = vmatpush1.msra.mxu0 0.0
        %395 = vmatprep.subr.mxu0 0.0
        %396 = vmatpush1.msra.mxu0 0.0
        %397 = vmatprep.subr.mxu0 0.0
        %398 = vmatpush1.msra.mxu0 0.0
        %399 = vmatprep.subr.mxu0 0.0
        %400 = vmatpush1.msra.mxu0 0.0
        %401 = vmatprep.subr.mxu0 0.0
        %402 = vmatpush1.msra.mxu0 0.0
        %403 = vmatprep.subr.mxu0 0.0
        %404 = vmatpush1.msra.mxu0 0.0
        %405 = vmatprep.subr.mxu0 0.0
        %406 = vmatpush1.msra.mxu0 0.0
        %407 = vmatprep.subr.mxu0 0.0
        %408 = vmatpush1.msra.mxu0 0.0
        %409 = vmatprep.subr.mxu0 0.0
        %410 = vmatpush1.msra.mxu0 0.0
        %411 = vmatprep.subr.mxu0 0.0
        %412 = vmatpush1.msra.mxu0 0.0
        %413 = vmatprep.subr.mxu0 0.0
        %414 = vmatpush1.msra.mxu0 0.0
        %415 = vmatprep.subr.mxu0 0.0
        %416 = vmatpush1.msra.mxu0 0.0
        %417 = vmatprep.subr.mxu0 0.0
        %418 = vmatpush1.msra.mxu0 0.0
        %419 = vmatprep.subr.mxu0 0.0
        %420 = vmatpush1.msra.mxu0 0.0
        %421 = vmatprep.subr.mxu0 0.0
        %422 = vmatpush1.msra.mxu0 0.0
        %423 = vmatprep.subr.mxu0 0.0
        %424 = vmatpush1.msra.mxu0 0.0
        %425 = vmatprep.subr.mxu0 0.0
        %426 = vmatpush1.msra.mxu0 0.0
        %427 = vmatprep.subr.mxu0 0.0
        %428 = vmatpush1.msra.mxu0 0.0
        %429 = vmatprep.subr.mxu0 0.0
        %430 = vmatpush1.msra.mxu0 0.0
        %431 = vmatprep.subr.mxu0 0.0
        %432 = vmatpush1.msra.mxu0 0.0
        %433 = vmatprep.subr.mxu0 0.0
        %434 = vmatpush1.msra.mxu0 0.0
        %435 = vmatprep.subr.mxu0 0.0
        %436 = vmatpush1.msra.mxu0 0.0
        %437 = vmatprep.mubr.f32.mxu0 0.0
        %438 = vmatmul.mubr.f32.gmra.mrb[0].mxu0 %v362
        %v439 = vpop.f32.mrb[0].mxu0
        %v440 = vadd.f32 %v343, %v439
        %v441 = vpop.f32.mrb[0].mxu0
        %442 = vmatprep.mubr.f32.mxu0 0.0
        %443 = vmatmul.mubr.f32.gmra.mrb[0].mxu0 %v365
        %v444 = vpop.f32.mrb[0].mxu0
        %v445 = vadd.f32 %v348, %v444
        %v446 = vpop.f32.mrb[0].mxu0
        %447 = vmatprep.mubr.f32.mxu0 0.0
        %448 = vmatmul.mubr.f32.gmra.mrb[0].mxu0 %v368
        %v449 = vpop.f32.mrb[0].mxu0
        %v450 = vadd.f32 %v353, %v449
        %v451 = vpop.f32.mrb[0].mxu0
        %452 = vmatprep.mubr.f32.mxu0 0.0
        %453 = vmatmul.mubr.f32.gmra.mrb[0].mxu0 %v371
        %v454 = vpop.f32.mrb[0].mxu0
        %v455 = vadd.f32 %v358, %v454
        %v456 = vpop.f32.mrb[0].mxu0
        %457 = vdwg.mxu0
        %458 = vst [vmem:[%s239] sm:$0xff] %v440
        %459 = vst [vmem:[%s239 + $0x8] sm:$0xff] %v445
        %460 = vst [vmem:[%s239 + $0x10] sm:$0xff] %v450
        %461 = vst [vmem:[%s239 + $0x18] sm:$0xff] %v455
        %s462 = sand.u32 %s153, 1
        %s463 = scalar_lea.sflag [#allocation3], %s462
        %s464 = sand.u32 %s153, 1
        %s465 = smul.addr %s464, 32
        %s466 = scalar_lea.vmem [#allocation2], %s465
        // Predicated region
        $region41: #{tpu_custom_call.1} parent=39 // pred_check
          %p467 = pneg %p163
        $region42: #{tpu_custom_call.1} parent=39 // pred_check_branch
          %469 = sbr.rel (%p467) target = $region44
        $region43: #{tpu_custom_call.1} parent=39 // pred_region
          %s471 = ssub.s32 512, 512
          %472 = vsyncadd %s463, %s471
          %s473 = smul.addr %s24, 4
          %s474 = smul.addr %s23, 8
          %s475 = sadd.s32 %s473, %s474
          %s476 = smul.addr %s475, 128
          %s477 = scalar_lea.hbm %s5, %s476
          %s478 = sshll.u32 %s466, 4
          %s479 = int_to_ptr.vmem [resolvable:$true] %s478
          %484 = dma.vmem_to_hbm [thread:$0]  %s479, 512, %s477, %s463, 128, 128, 8
        $region44: #{tpu_custom_call.1} parent=39 // pred_fallthru
          _
      $region40: #{tpu_custom_call.1} parent=5 // pred_fallthru
        _
      %p485 = scmp.le.s32.totalorder 2, %s14
      // Predicated region
      $region45: #{tpu_custom_call.1} parent=5 // pred_check
        %p486 = pneg %p485
      $region46: #{tpu_custom_call.1} parent=5 // pred_check_branch
        %488 = sbr.rel (%p486) target = $region48
      $region47: #{tpu_custom_call.1} parent=5 // pred_region
        %s489 = ssub.s32 %s14, 2
        // Predicated region
        $region49: #{tpu_custom_call.1} parent=47 // pred_check
          %p490 = pneg %p169
        $region50: #{tpu_custom_call.1} parent=47 // pred_check_branch
          %492 = sbr.rel (%p490) target = $region52
        $region51: #{tpu_custom_call.1} parent=47 // pred_region
          %s493 = sand.u32 %s154, 1
          %s494 = scalar_lea.sflag [#allocation3], %s493
          %s495 = sand.u32 %s154, 1
          %s496 = smul.addr %s495, 32
          %s497 = scalar_lea.vmem [#allocation2], %s496
          %498 = dma.done %s494, 512
        $region52: #{tpu_custom_call.1} parent=47 // pred_fallthru
          _
      $region48: #{tpu_custom_call.1} parent=5 // pred_fallthru
        _
    $region6: #{tpu_custom_call.1} parent=1 // loop_footer
      %s18 = sadd.s32 1, %s14
    $region7: #{tpu_custom_call.1} parent=1 // loop_footer_branch
      %13 = sbr.rel target = $region3
    $region8: #{tpu_custom_call.1} parent=1 // loop_exit
      _
    %499 = vsyncpa [#allocation3], 1
    %s500 = scalar_lea.sflag [#allocation3], 1
    %501 = vsyncpa %s500, 1

</llo_original>
